<compile_context>
chip_gen: v7x
topology: tpu7x:2x2x1
jax: 0.10.0
libtpu: 0.0.40
codegen_flags: <defaults>
</compile_context>

<pallas_src>
import functools

import jax
import jax.numpy as jnp
from jax import lax
from jax.experimental import pallas as pl
from jax.experimental.pallas import tpu as pltpu


def _round_up(x, m):
    return ((x + m - 1) // m) * m


def _conv_stats_kernel(x_ref, w_ref, b_ref, y_ref, stats_ref, slab_ref, *,
                       k_size, stride, c_in, kk, tl, l_out):
    # x_ref:     (1, C_in, Lp)      zero-padded input, full length resident
    # w_ref:     (C_out, kk_pad)    tap-major / channel-minor weight
    # b_ref:     (C_out, 1)         conv bias
    # y_ref:     (1, C_out, TL)     f32 conv+bias tile (lane-dense)
    # stats_ref: (1, C_out, 2)      per-channel [sum, sumsq], resident across L
    # slab_ref:  (kk_pad, TL)       im2col scratch
    l = pl.program_id(1)

    # New sample (stats block index changed) -> reset the accumulator.
    @pl.when(l == 0)
    def _():
        stats_ref[...] = jnp.zeros_like(stats_ref)

    kk_pad = slab_ref.shape[0]
    if kk_pad > kk:  # zero contraction-padding rows (scratch is never zeroed)
        slab_ref[kk:, :] = jnp.zeros((kk_pad - kk, tl), slab_ref.dtype)

    start = pl.multiple_of(l * (tl * stride), 128)
    if stride == 1:
        # One aligned window load; taps are static value slices stored into
        # the slab scratch (no concatenate).
        xw = x_ref[0, :, pl.ds(start, tl + 128)]            # (C_in, TL + 128)
        for k in range(k_size):
            slab_ref[k * c_in:(k + 1) * c_in, :] = xw[:, k:k + tl]
    else:
        # TODO(synk): phase-reshape trick to avoid strided lane reads.
        for k in range(k_size):
            slab_ref[k * c_in:(k + 1) * c_in, :] = (
                x_ref[0, :, pl.ds(start + k, tl, stride)])

    # Single 2-D MXU matmul in native dtype, f32 accumulation; add conv bias.
    acc = jnp.dot(w_ref[...], slab_ref[...],
                  preferred_element_type=jnp.float32)        # (C_out, TL)
    acc = acc + b_ref[...].astype(jnp.float32)               # (C_out, 1) bcast

    # Lane-dense store of the full computed tile (tail cols sliced later).
    y_ref[0] = acc.astype(y_ref.dtype)

    # GroupNorm(1 group) statistics: mask columns beyond l_out, accumulate
    # per-channel partial sums (lane reduce -> one column).
    c_out = acc.shape[0]
    col = l * tl + lax.broadcasted_iota(jnp.int32, (c_out, tl), 1)
    accm = jnp.where(col < l_out, acc, 0.0)
    stats_ref[0, :, 0:1] += jnp.sum(accm, axis=1, keepdims=True)
    stats_ref[0, :, 1:2] += jnp.sum(accm * accm, axis=1, keepdims=True)


def _norm_act_kernel(y_ref, p_ref, o_ref):
    # y_ref: (1, C_out, TL) f32 ; p_ref: (1, C_out, 3) [scale, shift, alpha]
    y = y_ref[0]
    p = p_ref[0].astype(jnp.float32)
    z = y * p[:, 0:1] + p[:, 1:2]
    o_ref[0] = jnp.where(z >= 0.0, z, p[:, 2:3] * z).astype(o_ref.dtype)


def _block_bytes(shape, dtype):
    """Coarse padded-tile size estimate for one VMEM buffer."""
    s = list(shape)
    if len(s) >= 1:
        s[-1] = _round_up(s[-1], 128)
    if len(s) >= 2:
        s[-2] = _round_up(s[-2], 8)
    n = 1
    for d in s:
        n *= d
    return n * jnp.dtype(dtype).itemsize


def conv_norm_act(x, weight, bias, gamma, beta, alpha, *,
                  stride=1, eps=1e-8, l_tile=512):
    """x: (B, C_in, L); weight: (C_out, C_in, K); bias/gamma/beta/alpha: (C_out,)."""
    B, c_in, L = x.shape
    c_out, c_in_w, k_size = weight.shape
    assert c_in_w == c_in, "groups != 1 not implemented"  # TODO(synk): grouped conv
    assert k_size <= 128
    padding = (k_size - 1) // 2
    l_out = (L + 2 * padding - k_size) // stride + 1

    # L tiling: lane-dense tiles (multiple of 128), ~l_tile lanes per step.
    tl = max(128, min(_round_up(l_tile, 128), _round_up(l_out, 128)))
    num_l = -(-l_out // tl)
    l_out_pad = num_l * tl

    # Zero-pad x ONCE in HBM: left conv halo plus enough zeros on the right so
    # every tile's aligned input window is in-bounds (lane-aligned length).
    lp = l_out_pad * stride + 128
    x_pad = jnp.pad(x, ((0, 0), (0, 0), (padding, lp - L - padding)))

    # Tap-major / channel-minor weight; contraction padded to sublane multiple.
    kk = k_size * c_in
    sublane = {4: 8, 2: 16, 1: 32}.get(jnp.dtype(x.dtype).itemsize, 8)
    kk_pad = _round_up(kk, sublane)
    w2 = jnp.transpose(weight, (0, 2, 1)).reshape(c_out, kk)
    w2 = jnp.pad(w2, ((0, 0), (0, kk_pad - kk)))
    bias2 = bias.reshape(c_out, 1)

    # ---------------- pass 1: conv + bias + per-sample stats ----------------
    kernel1 = functools.partial(
        _conv_stats_kernel, k_size=k_size, stride=stride, c_in=c_in, kk=kk,
        tl=tl, l_out=l_out)

    vmem1 = int(
        2 * _block_bytes((1, c_in, lp), x.dtype) +
        2 * _block_bytes((c_out, kk_pad), w2.dtype) +
        2 * _block_bytes((c_out, 1), bias2.dtype) +
        2 * _block_bytes((1, c_out, tl), jnp.float32) +
        2 * _block_bytes((1, c_out, 2), jnp.float32) +
        _block_bytes((kk_pad, tl), x.dtype))
    vmem1 = min(max(2 * vmem1 + (1 << 20), 16 << 20), 100 << 20)

    y_raw, stats = pl.pallas_call(
        kernel1,
        out_shape=(
            jax.ShapeDtypeStruct((B, c_out, l_out_pad), jnp.float32),
            jax.ShapeDtypeStruct((B, c_out, 2), jnp.float32),
        ),
        grid_spec=pltpu.PrefetchScalarGridSpec(
            num_scalar_prefetch=0,
            grid=(B, num_l),
            in_specs=[
                # TODO(synk): for extreme L, replace the full-length x block
                # with a manual halo DMA (pl.ANY + make_async_copy).
                pl.BlockSpec((1, c_in, lp), lambda b, l: (b, 0, 0)),
                pl.BlockSpec((c_out, kk_pad), lambda b, l: (0, 0)),
                pl.BlockSpec((c_out, 1), lambda b, l: (0, 0)),
            ],
            out_specs=[
                pl.BlockSpec((1, c_out, tl), lambda b, l: (b, 0, l)),
                pl.BlockSpec((1, c_out, 2), lambda b, l: (b, 0, 0)),
            ],
            scratch_shapes=[pltpu.VMEM((kk_pad, tl), x.dtype)],
        ),
        compiler_params=pltpu.CompilerParams(
            dimension_semantics=("parallel", "arbitrary"),
            vmem_limit_bytes=vmem1),
    )(x_pad, w2, bias2)

    # ---- tiny XLA glue: fold GroupNorm(1) + affine into scale / shift ------
    n_valid = float(c_out * l_out)
    sums = jnp.sum(stats[:, :, 0], axis=1)
    sumsq = jnp.sum(stats[:, :, 1], axis=1)
    mean = sums / n_valid
    var = jnp.maximum(sumsq / n_valid - mean * mean, 0.0)
    inv_std = lax.rsqrt(var + eps)                                  # (B,)
    scale = gamma[None, :].astype(jnp.float32) * inv_std[:, None]   # (B, C_out)
    shift = beta[None, :].astype(jnp.float32) - mean[:, None] * scale
    alpha_b = jnp.broadcast_to(alpha[None, :].astype(jnp.float32), (B, c_out))
    params2 = jnp.stack([scale, shift, alpha_b], axis=-1)           # (B, C_out, 3)

    # ---------------- pass 2: normalize + PReLU (elementwise) ---------------
    vmem2 = int(
        2 * _block_bytes((1, c_out, tl), jnp.float32) +
        2 * _block_bytes((1, c_out, 3), jnp.float32) +
        2 * _block_bytes((1, c_out, tl), x.dtype))
    vmem2 = min(max(2 * vmem2 + (1 << 20), 16 << 20), 100 << 20)

    out_pad = pl.pallas_call(
        _norm_act_kernel,
        out_shape=jax.ShapeDtypeStruct((B, c_out, l_out_pad), x.dtype),
        grid_spec=pltpu.PrefetchScalarGridSpec(
            num_scalar_prefetch=0,
            grid=(B, num_l),
            in_specs=[
                pl.BlockSpec((1, c_out, tl), lambda b, l: (b, 0, l)),
                pl.BlockSpec((1, c_out, 3), lambda b, l: (b, 0, 0)),
            ],
            out_specs=pl.BlockSpec((1, c_out, tl), lambda b, l: (b, 0, l)),
        ),
        compiler_params=pltpu.CompilerParams(
            dimension_semantics=("parallel", "parallel"),
            vmem_limit_bytes=vmem2),
    )(y_raw, params2)

    return out_pad[:, :, :l_out]


if __name__ == "__main__":
    # Small shapes consistent with the module: nIn=4, nOut=8, kSize=3, stride=1.
    B, C_IN, C_OUT, K, L = 2, 4, 8, 3, 16

    key = jax.random.PRNGKey(0)
    kx, kw, kb = jax.random.split(key, 3)

    x = jax.random.normal(kx, (B, C_IN, L), dtype=jnp.float32)

    fan_in = C_IN * K
    bound = 1.0 / (fan_in ** 0.5)
    weight = jax.random.uniform(kw, (C_OUT, C_IN, K), jnp.float32, -bound, bound)
    bias = jax.random.uniform(kb, (C_OUT,), jnp.float32, -bound, bound)
    gamma = jnp.ones((C_OUT,), jnp.float32)        # GroupNorm weight
    beta = jnp.zeros((C_OUT,), jnp.float32)        # GroupNorm bias
    alpha = jnp.full((C_OUT,), 0.25, jnp.float32)  # PReLU default slope

    out = conv_norm_act(x, weight, bias, gamma, beta, alpha, stride=1, eps=1e-8)
    out = jax.block_until_ready(out)

    # Pure-JAX reference of the same math (module semantics).
    def ref(x, w, b, g, bt_, a, eps=1e-8):
        y = lax.conv_general_dilated(
            x, w, window_strides=(1,), padding=((1, 1),),
            dimension_numbers=("NCH", "OIH", "NCH"))
        y = y + b[None, :, None]
        mean = y.mean(axis=(1, 2), keepdims=True)
        var = ((y - mean) ** 2).mean(axis=(1, 2), keepdims=True)
        y = (y - mean) / jnp.sqrt(var + eps)
        y = y * g[None, :, None] + bt_[None, :, None]
        return jnp.where(y >= 0, y, a[None, :, None] * y)

    expected = ref(x, weight, bias, gamma, beta, alpha)
    assert out.shape == (B, C_OUT, L)
    assert jnp.allclose(out, expected, atol=1e-4, rtol=1e-4), (
        float(jnp.max(jnp.abs(out - expected))))
    print("KERNEL_OK")
</pallas_src>

<mosaic_0001>
module attributes {stable_mosaic.version = 11 : i64} {
  func.func @_conv_stats_kernel(%arg0: i32, %arg1: i32, %arg2: memref<1x4x256xf32, #tpu.memory_space<vmem>>, %arg3: memref<8x16xf32, #tpu.memory_space<vmem>>, %arg4: memref<8x1xf32, #tpu.memory_space<vmem>>, %arg5: memref<1x8x128xf32, #tpu.memory_space<vmem>>, %arg6: memref<1x8x2xf32, #tpu.memory_space<vmem>>, %arg7: memref<16x128xf32, #tpu.memory_space<vmem>>) attributes {dimension_semantics = [#tpu.dimension_semantics<parallel>, #tpu.dimension_semantics<arbitrary>], iteration_bounds = array<i64: 2, 1>, scalar_prefetch = 0 : i64, scratch_operands = 1 : i64, tpu.core_type = #tpu.core_type<tc>, window_params = [{transform_indices = @transform_0, window_bounds = array<i64: 1, 4, 256>}, {pipeline_mode = #tpu.pipeline_mode<synchronous>, transform_indices = @transform_1, window_bounds = array<i64: 8, 16>}, {pipeline_mode = #tpu.pipeline_mode<synchronous>, transform_indices = @transform_2, window_bounds = array<i64: 8, 1>}, {transform_indices = @transform_3, window_bounds = array<i64: 1, 8, 128>}, {transform_indices = @transform_4, window_bounds = array<i64: 1, 8, 2>}]} {
    %c0_i32 = arith.constant 0 : i32
    %0 = arith.cmpi eq, %arg1, %c0_i32 : i32
    %1 = arith.extui %0 : i1 to i32
    %c0_i32_0 = arith.constant 0 : i32
    %2 = arith.cmpi ne, %1, %c0_i32_0 : i32
    scf.if %2 {
      %cst_32 = arith.constant 0.000000e+00 : f32
      %50 = vector.broadcast %cst_32 : f32 to vector<1x8x2xf32>
      %c0_33 = arith.constant 0 : index
      %c0_34 = arith.constant 0 : index
      %c0_35 = arith.constant 0 : index
      %51 = vector.load %arg6[%c0_33, %c0_34, %c0_35] : memref<1x8x2xf32, #tpu.memory_space<vmem>>, vector<1x8x2xf32>
      tpu.vector_store %arg6[%c0_33, %c0_34, %c0_35], %50 {strides = array<i32>} : memref<1x8x2xf32, #tpu.memory_space<vmem>>, vector<1x8x2xf32>,
    } else {
    }
    %cst = arith.constant 0.000000e+00 : f32
    %3 = vector.broadcast %cst : f32 to vector<4x128xf32>
    %c12 = arith.constant 12 : index
    %c0 = arith.constant 0 : index
    %4 = vector.load %arg7[%c12, %c0] : memref<16x128xf32, #tpu.memory_space<vmem>>, vector<4x128xf32>
    tpu.vector_store %arg7[%c12, %c0], %3 {strides = array<i32>} : memref<16x128xf32, #tpu.memory_space<vmem>>, vector<4x128xf32>,
    %c128_i32 = arith.constant 128 : i32
    %5 = arith.muli %arg1, %c128_i32 : i32
    %6 = tpu.assume_multiple %5, 128 : i32
    %c0_1 = arith.constant 0 : index
    %c0_2 = arith.constant 0 : index
    %7 = arith.index_cast %6 : i32 to index
    %8 = vector.load %arg2[%c0_1, %c0_2, %7] : memref<1x4x256xf32, #tpu.memory_space<vmem>>, vector<1x4x256xf32>
    %9 = vector.shape_cast %8 : vector<1x4x256xf32> to vector<4x256xf32>
    %10 = vector.extract_strided_slice %9 {offsets = [0, 0], sizes = [4, 128], strides = [1, 1]} : vector<4x256xf32> to vector<4x128xf32>
    %c0_3 = arith.constant 0 : index
    %c0_4 = arith.constant 0 : index
    %11 = vector.load %arg7[%c0_3, %c0_4] : memref<16x128xf32, #tpu.memory_space<vmem>>, vector<4x128xf32>
    tpu.vector_store %arg7[%c0_3, %c0_4], %10 {strides = array<i32>} : memref<16x128xf32, #tpu.memory_space<vmem>>, vector<4x128xf32>,
    %12 = vector.extract_strided_slice %9 {offsets = [0, 1], sizes = [4, 128], strides = [1, 1]} : vector<4x256xf32> to vector<4x128xf32>
    %c4 = arith.constant 4 : index
    %c0_5 = arith.constant 0 : index
    %13 = vector.load %arg7[%c4, %c0_5] : memref<16x128xf32, #tpu.memory_space<vmem>>, vector<4x128xf32>
    tpu.vector_store %arg7[%c4, %c0_5], %12 {strides = array<i32>} : memref<16x128xf32, #tpu.memory_space<vmem>>, vector<4x128xf32>,
    %14 = vector.extract_strided_slice %9 {offsets = [0, 2], sizes = [4, 128], strides = [1, 1]} : vector<4x256xf32> to vector<4x128xf32>
    %c8 = arith.constant 8 : index
    %c0_6 = arith.constant 0 : index
    %15 = vector.load %arg7[%c8, %c0_6] : memref<16x128xf32, #tpu.memory_space<vmem>>, vector<4x128xf32>
    tpu.vector_store %arg7[%c8, %c0_6], %14 {strides = array<i32>} : memref<16x128xf32, #tpu.memory_space<vmem>>, vector<4x128xf32>,
    %c0_7 = arith.constant 0 : index
    %c0_8 = arith.constant 0 : index
    %16 = vector.load %arg3[%c0_7, %c0_8] : memref<8x16xf32, #tpu.memory_space<vmem>>, vector<8x16xf32>
    %c0_9 = arith.constant 0 : index
    %c0_10 = arith.constant 0 : index
    %17 = vector.load %arg7[%c0_9, %c0_10] : memref<16x128xf32, #tpu.memory_space<vmem>>, vector<16x128xf32>
    %cst_11 = arith.constant dense<0.000000e+00> : vector<8x128xf32>
    %18 = tpu.matmul %16, %17, %cst_11 {dimension_numbers = #tpu.dot_dimension_numbers<[1], [0], [0], [1], [0, 0, 1, 1], [], []>} : vector<8x16xf32>, vector<16x128xf32>, vector<8x128xf32> -> vector<8x128xf32>
    %c0_12 = arith.constant 0 : index
    %c0_13 = arith.constant 0 : index
    %19 = vector.load %arg4[%c0_12, %c0_13] : memref<8x1xf32, #tpu.memory_space<vmem>>, vector<8x1xf32>
    %20 = vector.broadcast %19 : vector<8x1xf32> to vector<8x128xf32>
    %21 = arith.addf %18, %20 : vector<8x128xf32>
    %c0_14 = arith.constant 0 : index
    %c0_15 = arith.constant 0 : index
    %c0_16 = arith.constant 0 : index
    %22 = vector.load %arg5[%c0_14, %c0_15, %c0_16] : memref<1x8x128xf32, #tpu.memory_space<vmem>>, vector<1x8x128xf32>
    %23 = vector.shape_cast %22 : vector<1x8x128xf32> to vector<8x128xf32>
    %24 = vector.shape_cast %21 : vector<8x128xf32> to vector<1x8x128xf32>
    tpu.vector_store %arg5[%c0_14, %c0_15, %c0_16], %24 {strides = array<i32>} : memref<1x8x128xf32, #tpu.memory_space<vmem>>, vector<1x8x128xf32>,
    %c128_i32_17 = arith.constant 128 : i32
    %25 = arith.muli %arg1, %c128_i32_17 : i32
    %26 = tpu.iota {dimensions = array<i32: 1>} : vector<8x128xi32>
    %27 = vector.broadcast %25 : i32 to vector<8x128xi32>
    %28 = arith.addi %27, %26 : vector<8x128xi32>
    %c16_i32 = arith.constant 16 : i32
    %29 = vector.broadcast %c16_i32 : i32 to vector<8x128xi32>
    %30 = arith.cmpi slt, %28, %29 : vector<8x128xi32>
    %cst_18 = arith.constant 0.000000e+00 : f32
    %31 = vector.broadcast %cst_18 : f32 to vector<8x128xf32>
    %32 = arith.select %30, %21, %31 : vector<8x128xi1>, vector<8x128xf32>
    %c0_19 = arith.constant 0 : index
    %c0_20 = arith.constant 0 : index
    %c0_21 = arith.constant 0 : index
    %33 = vector.load %arg6[%c0_19, %c0_20, %c0_21] : memref<1x8x2xf32, #tpu.memory_space<vmem>>, vector<1x8x1xf32>
    %34 = vector.shape_cast %33 : vector<1x8x1xf32> to vector<8x1xf32>
    %cst_22 = arith.constant dense<0.000000e+00> : vector<8xf32>
    %35 = vector.multi_reduction <add>, %32, %cst_22 [1] : vector<8x128xf32> to vector<8xf32>
    %36 = vector.shape_cast %35 : vector<8xf32> to vector<8x1xf32>
    %37 = arith.addf %34, %36 : vector<8x1xf32>
    %c0_23 = arith.constant 0 : index
    %c0_24 = arith.constant 0 : index
    %c0_25 = arith.constant 0 : index
    %38 = vector.load %arg6[%c0_23, %c0_24, %c0_25] : memref<1x8x2xf32, #tpu.memory_space<vmem>>, vector<1x8x1xf32>
    %39 = vector.shape_cast %38 : vector<1x8x1xf32> to vector<8x1xf32>
    %40 = vector.shape_cast %37 : vector<8x1xf32> to vector<1x8x1xf32>
    tpu.vector_store %arg6[%c0_23, %c0_24, %c0_25], %40 {strides = array<i32>} : memref<1x8x2xf32, #tpu.memory_space<vmem>>, vector<1x8x1xf32>,
    %c0_26 = arith.constant 0 : index
    %c0_27 = arith.constant 0 : index
    %c1 = arith.constant 1 : index
    %41 = vector.load %arg6[%c0_26, %c0_27, %c1] : memref<1x8x2xf32, #tpu.memory_space<vmem>>, vector<1x8x1xf32>
    %42 = vector.shape_cast %41 : vector<1x8x1xf32> to vector<8x1xf32>
    %43 = arith.mulf %32, %32 : vector<8x128xf32>
    %cst_28 = arith.constant dense<0.000000e+00> : vector<8xf32>
    %44 = vector.multi_reduction <add>, %43, %cst_28 [1] : vector<8x128xf32> to vector<8xf32>
    %45 = vector.shape_cast %44 : vector<8xf32> to vector<8x1xf32>
    %46 = arith.addf %42, %45 : vector<8x1xf32>
    %c0_29 = arith.constant 0 : index
    %c0_30 = arith.constant 0 : index
    %c1_31 = arith.constant 1 : index
    %47 = vector.load %arg6[%c0_29, %c0_30, %c1_31] : memref<1x8x2xf32, #tpu.memory_space<vmem>>, vector<1x8x1xf32>
    %48 = vector.shape_cast %47 : vector<1x8x1xf32> to vector<8x1xf32>
    %49 = vector.shape_cast %46 : vector<8x1xf32> to vector<1x8x1xf32>
    tpu.vector_store %arg6[%c0_29, %c0_30, %c1_31], %49 {strides = array<i32>} : memref<1x8x2xf32, #tpu.memory_space<vmem>>, vector<1x8x1xf32>,
    return
  }
  func.func @transform_0(%arg0: i32, %arg1: i32) -> (i32, i32, i32) {
    %c0_i32 = arith.constant 0 : i32
    %c0_i32_0 = arith.constant 0 : i32
    %c0_i32_1 = arith.constant 0 : i32
    return %arg0, %c0_i32, %c0_i32_0 : i32, i32, i32
  }
  func.func @transform_1(%arg0: i32, %arg1: i32) -> (i32, i32) {
    %c0_i32 = arith.constant 0 : i32
    %c0_i32_0 = arith.constant 0 : i32
    %c0_i32_1 = arith.constant 0 : i32
    return %c0_i32, %c0_i32_0 : i32, i32
  }
  func.func @transform_2(%arg0: i32, %arg1: i32) -> (i32, i32) {
    %c0_i32 = arith.constant 0 : i32
    %c0_i32_0 = arith.constant 0 : i32
    %c0_i32_1 = arith.constant 0 : i32
    return %c0_i32, %c0_i32_0 : i32, i32
  }
  func.func @transform_3(%arg0: i32, %arg1: i32) -> (i32, i32, i32) {
    %c0_i32 = arith.constant 0 : i32
    %c0_i32_0 = arith.constant 0 : i32
    return %arg0, %c0_i32, %arg1 : i32, i32, i32
  }
  func.func @transform_4(%arg0: i32, %arg1: i32) -> (i32, i32, i32) {
    %c0_i32 = arith.constant 0 : i32
    %c0_i32_0 = arith.constant 0 : i32
    %c0_i32_1 = arith.constant 0 : i32
    return %arg0, %c0_i32, %c0_i32_0 : i32, i32, i32
  }
}

</mosaic_0001>

<llo_original>
// kernel: tpu_custom_call.1
$region0: #{tpu_custom_call.1}
  #allocation0 [shape = 'u32[]', space=smem, size = 0x4, offset = 0x4, fixed_abs, tag = 'smem constant byte address 0x4 - core index']
  #allocation1 [shape = 'u32[144,128]{1,0:T(1,128)}', space=vmem, size = 0x12000, scoped, tag = 'internal scratch']
  #allocation2 [shape = 'f32[16,128]{1,0:T(8,128)}', space=vmem, size = 0x2000, scoped, tag = 'scratch operand']
  %s0 = inlined_call_operand.hbm [shape: f32[2,4,256], index: 0, kind: input, shape index: {}]
  %s1 = inlined_call_operand.vmem [shape: f32[8,16], index: 1, kind: input, shape index: {}]
  %s2 = inlined_call_operand.vmem [shape: f32[8,1], index: 2, kind: input, shape index: {}]
  %s3 = inlined_call_operand.hbm [shape: f32[2,8,128], index: 3, kind: output, shape index: {0}]
  %s4 = inlined_call_operand.vmem [shape: f32[2,8,2], index: 4, kind: output, shape index: {1}]
  %5 = xla_tuple %s3, %s4
  %s6 = sld [smem:[#allocation0]]
  $region61: #{tpu_custom_call.1} parent=0
    _
  %s8 = ssub.s32 1, %s6
  %s9 = scalar_select 0, %s8, %s6
  $region1: #{tpu_custom_call.1} parent=0
    #allocation3 [shape = 'u8[8192]{0}', space=vmem, size = 0x2000, scoped, tag = 'input window, operand 0']
    #allocation4 [shape = 's32[2]{0}', space=sflag, size = 0x8, scoped, tag = 'scoped memory for tpu_custom_call.1']
    #allocation5 [shape = 's32[2]{0}', space=sflag, size = 0x8, scoped, tag = 'scoped memory for tpu_custom_call.1']
    #allocation6 [shape = 'u8[8192]{0}', space=vmem, size = 0x2000, scoped, tag = 'output window, operand 0']
    %10 = vsyncpa [#allocation4], 0
    %s11 = scalar_lea.sflag [#allocation4], 1
    %12 = vsyncpa %s11, 0
    %13 = vsyncpa [#allocation5], 0
    %s14 = scalar_lea.sflag [#allocation5], 1
    %15 = vsyncpa %s14, 0
    loop: start=0, step=1, limit=4
    $region2: #{tpu_custom_call.1} parent=1 // loop_pre_header
      _
    $region3: #{tpu_custom_call.1} parent=1 // loop_header
      %s17 = sphi 0, %s21
      %p18 = scmp.ge.s32.totalorder %s17, 4
      %s24 = sphi 0, %s36
      %s25 = sphi 0, %s32
      %s26 = sphi 0, %s24
      %s27 = sphi 0, %s25
      %s28 = sphi 0, %s26
      %s29 = sphi 0, %s27
      %s39 = sphi 0, %s41
      %s42 = sphi 0, %s39
      %s43 = sphi 0, %s42
      %s59 = sphi 0, %s43
      %s63 = sphi 0, %s63
      %s65 = sphi 0, %s63
      %s66 = sphi 0, %s65
      %s80 = sphi 0, %s66
      %s84 = sphi 0, %s84
      %s86 = sphi 0, %s84
      %s87 = sphi 0, %s86
      %s101 = sphi 0, %s87
      %s109 = sphi 0, %s111
      %s112 = sphi 0, %s109
      %s113 = sphi 0, %s112
      %s129 = sphi 0, %s113
      %s135 = sphi 0, %s137
      %s138 = sphi 0, %s135
      %s139 = sphi 0, %s138
      %s155 = sphi 0, %s139
    $region4: #{tpu_custom_call.1} parent=1 // loop_header_branch
      %20 = sbr.rel (%p18) target = $region8
    $region5: #{tpu_custom_call.1} parent=1 // loop_body
      %s22 = ssub.s32 %s17, 1
      %s23 = ssub.s32 %s17, 2
      %s30 = sadd.s32 1, %s25
      %p31 = scmp.ge.s32.totalorder %s30, 1
      %s32 = scalar_select %p31, 0, %s30
      %s33 = sadd.s32 1, %s24
      %s34 = scalar_select %p31, %s33, %s24
      %p35 = scmp.ge.s32.totalorder %s34, 2
      %s36 = scalar_select %p35, 0, %s34
      %s37 = ssub.s32 %s24, %s36
      %p38 = scmp.eq.s32.totalorder %s37, 0
      %s40 = sadd.s32 %s39, 1
      %s41 = scalar_select %p38, %s39, %s40
      %p44 = pneg %p38
      %p45 = scmp.eq.s32.totalorder %s17, 1
      %p46 = por %p44, %p45
      %p47 = scmp.ne.s32.totalorder %s39, %s42
      %p48 = scmp.eq.s32.totalorder %s17, 0
      %p49 = por %p47, %p48
      %p50 = scmp.ne.s32.totalorder %s39, %s42
      %p51 = scmp.eq.s32.totalorder %s22, 1
      %p52 = por %p50, %p51
      %p53 = scmp.ne.s32.totalorder %s42, %s43
      %p54 = scmp.eq.s32.totalorder %s22, 0
      %p55 = por %p53, %p54
      %p56 = scmp.ne.s32.totalorder %s42, %s43
      %p57 = scmp.eq.s32.totalorder %s23, 1
      %p58 = por %p56, %p57
      %p60 = scmp.ne.s32.totalorder %s43, %s59
      %p61 = scmp.eq.s32.totalorder %s23, 0
      %p62 = por %p60, %p61
      %s64 = sadd.s32 %s63, 1
      %p67 = scmp.eq.s32.totalorder %s17, 1
      %p68 = scmp.ne.s32.totalorder %s63, %s65
      %p69 = scmp.eq.s32.totalorder %s17, 0
      %p70 = por %p68, %p69
      %p71 = scmp.ne.s32.totalorder %s63, %s65
      %p72 = scmp.eq.s32.totalorder %s22, 1
      %p73 = por %p71, %p72
      %p74 = scmp.ne.s32.totalorder %s65, %s66
      %p75 = scmp.eq.s32.totalorder %s22, 0
      %p76 = por %p74, %p75
      %p77 = scmp.ne.s32.totalorder %s65, %s66
      %p78 = scmp.eq.s32.totalorder %s23, 1
      %p79 = por %p77, %p78
      %p81 = scmp.ne.s32.totalorder %s66, %s80
      %p82 = scmp.eq.s32.totalorder %s23, 0
      %p83 = por %p81, %p82
      %s85 = sadd.s32 %s84, 1
      %p88 = scmp.eq.s32.totalorder %s17, 1
      %p89 = scmp.ne.s32.totalorder %s84, %s86
      %p90 = scmp.eq.s32.totalorder %s17, 0
      %p91 = por %p89, %p90
      %p92 = scmp.ne.s32.totalorder %s84, %s86
      %p93 = scmp.eq.s32.totalorder %s22, 1
      %p94 = por %p92, %p93
      %p95 = scmp.ne.s32.totalorder %s86, %s87
      %p96 = scmp.eq.s32.totalorder %s22, 0
      %p97 = por %p95, %p96
      %p98 = scmp.ne.s32.totalorder %s86, %s87
      %p99 = scmp.eq.s32.totalorder %s23, 1
      %p100 = por %p98, %p99
      %p102 = scmp.ne.s32.totalorder %s87, %s101
      %p103 = scmp.eq.s32.totalorder %s23, 0
      %p104 = por %p102, %p103
      %s105 = ssub.s32 %s24, %s36
      %s106 = ssub.s32 %s25, %s32
      %s107 = sor.u32 %s105, %s106
      %p108 = scmp.eq.s32.totalorder %s107, 0
      %s110 = sadd.s32 %s109, 1
      %s111 = scalar_select %p108, %s109, %s110
      %p114 = pneg %p108
      %p115 = scmp.eq.s32.totalorder %s17, 1
      %p116 = por %p114, %p115
      %p117 = scmp.ne.s32.totalorder %s109, %s112
      %p118 = scmp.eq.s32.totalorder %s17, 0
      %p119 = por %p117, %p118
      %p120 = scmp.ne.s32.totalorder %s109, %s112
      %p121 = scmp.eq.s32.totalorder %s22, 1
      %p122 = por %p120, %p121
      %p123 = scmp.ne.s32.totalorder %s112, %s113
      %p124 = scmp.eq.s32.totalorder %s22, 0
      %p125 = por %p123, %p124
      %p126 = scmp.ne.s32.totalorder %s112, %s113
      %p127 = scmp.eq.s32.totalorder %s23, 1
      %p128 = por %p126, %p127
      %p130 = scmp.ne.s32.totalorder %s113, %s129
      %p131 = scmp.eq.s32.totalorder %s23, 0
      %p132 = por %p130, %p131
      %s133 = ssub.s32 %s24, %s36
      %p134 = scmp.eq.s32.totalorder %s133, 0
      %s136 = sadd.s32 %s135, 1
      %s137 = scalar_select %p134, %s135, %s136
      %p140 = pneg %p134
      %p141 = scmp.eq.s32.totalorder %s17, 1
      %p142 = por %p140, %p141
      %p143 = scmp.ne.s32.totalorder %s135, %s138
      %p144 = scmp.eq.s32.totalorder %s17, 0
      %p145 = por %p143, %p144
      %p146 = scmp.ne.s32.totalorder %s135, %s138
      %p147 = scmp.eq.s32.totalorder %s22, 1
      %p148 = por %p146, %p147
      %p149 = scmp.ne.s32.totalorder %s138, %s139
      %p150 = scmp.eq.s32.totalorder %s22, 0
      %p151 = por %p149, %p150
      %p152 = scmp.ne.s32.totalorder %s138, %s139
      %p153 = scmp.eq.s32.totalorder %s23, 1
      %p154 = por %p152, %p153
      %p156 = scmp.ne.s32.totalorder %s139, %s155
      %p157 = scmp.eq.s32.totalorder %s23, 0
      %p158 = por %p156, %p157
      %p159 = scmp.le.s32.totalorder 1, %s17
      %p160 = scmp.lt.s32.totalorder %s17, 3
      %p161 = pnand %p159, %p160
      %p162 = pneg %p161
      // Predicated region
      $region9: #{tpu_custom_call.1} parent=5 // pred_check
        _
      $region10: #{tpu_custom_call.1} parent=5 // pred_check_branch
        %164 = sbr.rel (%p161) target = $region12
      $region11: #{tpu_custom_call.1} parent=5 // pred_region
        %s165 = ssub.s32 %s17, 1
        // Predicated region
        $region13: #{tpu_custom_call.1} parent=11 // pred_check
          %p166 = pneg %p76
        $region14: #{tpu_custom_call.1} parent=11 // pred_check_branch
          %168 = sbr.rel (%p166) target = $region16
        $region15: #{tpu_custom_call.1} parent=11 // pred_region
          _
        $region16: #{tpu_custom_call.1} parent=11 // pred_fallthru
          _
        // Predicated region
        $region17: #{tpu_custom_call.1} parent=11 // pred_check
          %p169 = pneg %p97
        $region18: #{tpu_custom_call.1} parent=11 // pred_check_branch
          %171 = sbr.rel (%p169) target = $region20
        $region19: #{tpu_custom_call.1} parent=11 // pred_region
          _
        $region20: #{tpu_custom_call.1} parent=11 // pred_fallthru
          _
      $region12: #{tpu_custom_call.1} parent=5 // pred_fallthru
        _
      %p172 = scmp.lt.s32.totalorder %s17, 2
      // Predicated region
      $region21: #{tpu_custom_call.1} parent=5 // pred_check
        %p173 = pneg %p172
      $region22: #{tpu_custom_call.1} parent=5 // pred_check_branch
        %175 = sbr.rel (%p173) target = $region24
      $region23: #{tpu_custom_call.1} parent=5 // pred_region
        // Predicated region
        $region25: #{tpu_custom_call.1} parent=23 // pred_check
          %p176 = pneg %p49
        $region26: #{tpu_custom_call.1} parent=23 // pred_check_branch
          %178 = sbr.rel (%p176) target = $region28
        $region27: #{tpu_custom_call.1} parent=23 // pred_region
          %s179 = sand.u32 %s39, 1
          %s180 = scalar_lea.sflag [#allocation4], %s179
          %s181 = sand.u32 %s39, 1
          %s182 = smul.addr %s181, 8
          %s183 = scalar_lea.vmem [#allocation3], %s182
          %s185 = ssub.s32 128, 128
          %186 = vsyncadd %s180, %s185
          %s187 = smul.addr %s24, 2
          %s188 = smul.addr %s187, 64
          %s189 = scalar_lea.hbm %s0, %s188
          %s191 = sshll.u32 %s183, 4
          %s192 = int_to_ptr.vmem [resolvable:$true] %s191
          %194 = dma.hbm_to_vmem [thread:$0]  %s189, 128, %s192, %s180
        $region28: #{tpu_custom_call.1} parent=23 // pred_fallthru
          _
      $region24: #{tpu_custom_call.1} parent=5 // pred_fallthru
        _
      %p195 = scmp.le.s32.totalorder 1, %s17
      %p196 = scmp.lt.s32.totalorder %s17, 3
      %p197 = pnand %p195, %p196
      %p198 = pneg %p197
      // Predicated region
      $region29: #{tpu_custom_call.1} parent=5 // pred_check
        _
      $region30: #{tpu_custom_call.1} parent=5 // pred_check_branch
        %200 = sbr.rel (%p197) target = $region32
      $region31: #{tpu_custom_call.1} parent=5 // pred_region
        %s201 = ssub.s32 %s17, 1
        %s202 = sand.u32 %s42, 1
        %s203 = scalar_lea.sflag [#allocation4], %s202
        %s204 = sand.u32 %s42, 1
        %s205 = smul.addr %s204, 8
        %s206 = scalar_lea.vmem [#allocation3], %s205
        // Predicated region
        $region33: #{tpu_custom_call.1} parent=31 // pred_check
          %p207 = pneg %p55
        $region34: #{tpu_custom_call.1} parent=31 // pred_check_branch
          %209 = sbr.rel (%p207) target = $region36
        $region35: #{tpu_custom_call.1} parent=31 // pred_region
          %210 = dma.done %s203, 128
        $region36: #{tpu_custom_call.1} parent=31 // pred_fallthru
          _
        %s211 = sand.u32 %s42, 1
        %s212 = scalar_lea.sflag [#allocation4], %s211
        %s213 = sand.u32 %s42, 1
        %s214 = smul.addr %s213, 8
        %s215 = scalar_lea.vmem [#allocation3], %s214
        %p216 = pneg %p55
        %p217 = pneg %p52
        %p218 = pneg %p76
        %p219 = pneg %p73
        %p220 = pneg %p97
        %p221 = pneg %p94
        %p222 = pneg %p125
        %p223 = pneg %p122
        %s224 = sand.u32 %s112, 1
        %s225 = scalar_lea.sflag [#allocation5], %s224
        %s226 = sand.u32 %s112, 1
        %s227 = smul.addr %s226, 8
        %s228 = scalar_lea.vmem [#allocation6], %s227
        %p229 = pneg %p151
        %p230 = pneg %p148
        %p231 = scmp.lt.s32.totalorder %s26, 1
        %s232 = scalar_select %p231, %s26, 1
        %s233 = smul.addr %s232, 8
        %s234 = scalar_lea.vmem %s4, %s233
        %p235 = scmp.lt.s32.totalorder %s26, 1
        %s236 = scalar_select %p235, %s26, 1
        %s237 = smul.addr %s236, 8
        %s238 = scalar_lea.vmem %s4, %s237
        %p239 = scmp.eq.s32.totalorder %s27, 0
        // Predicated region
        $region37: #{tpu_custom_call.1} parent=31 // pred_check
          %p240 = pneg %p239
        $region38: #{tpu_custom_call.1} parent=31 // pred_check_branch
          %242 = sbr.rel (%p240) target = $region40
        $region39: #{tpu_custom_call.1} parent=31 // pred_region
          %vm243 = vcmask 15360
          %244 = vst.msk [vmem:[%s238] sm:$0xff] %vm243, 0.0
        $region40: #{tpu_custom_call.1} parent=31 // pred_fallthru
          _
        %245 = vst [vmem:[#allocation2 + $0xc] sm:$0xf] 0.0
        %s246 = smul.u32 %s27, 128
        %s247 = sshra.s32 %s246, 7
        %s248 = sand.u32 %s246, 127
        %s249 = smul.addr %s247, 4
        %s250 = scalar_lea.vmem %s206, %s249 [#allocation3]
        %v251 = vld [vmem:[%s250] sm:$0xff]
        %252 = vst [vmem:[#allocation2] sm:$0xf] %v251
        %v254 = vcombine.high %v251, %v251
        %255 = vrot.lane.b32.xlu0 %v251, 127
        %v256 = vpop.permute.xlu0 %255
        %257 = vrot.lane.b32.xlu0 %v254, 127
        %v258 = vpop.permute.xlu0 %257
        %vm259 = vcmask 1039360
        %v260 = vsel %vm259, %v256, %v258
        %262 = vst [vmem:[#allocation2 + $0x4] sm:$0xf] %v260
        %263 = vrot.lane.b32.xlu0 %v251, 126
        %v264 = vpop.permute.xlu0 %263
        %265 = vrot.lane.b32.xlu0 %v254, 126
        %v266 = vpop.permute.xlu0 %265
        %vm267 = vcmask 1031168
        %v268 = vsel %vm267, %v264, %v266
        %270 = vst [vmem:[#allocation2 + $0x8] sm:$0xf] %v268
        %v271 = vld [vmem:[%s1] sm:$0xff]
        %v272 = vld [vmem:[#allocation2] sm:$0xff]
        %v273 = vld [vmem:[#allocation2 + $0x8] sm:$0xff]
        %v274 = vld [vmem:[%s2] sm:$0xff]
        %276 = vset.pattern.permute.xlu0 0
        %277 = vperm.xlu0 %276, %v274
        %v278 = vpop.permute.xlu0 %277
        %vm280 = vcmask 130048
        %v282 = vsel %vm280, %v271, 0
        %284 = vmatprep.subr.mxu0 0.0
        %285 = vmatpush1.msra.mxu0 %v272
        %286 = vmatprep.subr.mxu0 0.0
        %287 = vmatpush1.msra.mxu0 %v273
        %288 = vmatprep.subr.mxu0 0.0
        %289 = vmatpush1.msra.mxu0 0.0
        %290 = vmatprep.subr.mxu0 0.0
        %291 = vmatpush1.msra.mxu0 0.0
        %292 = vmatprep.subr.mxu0 0.0
        %293 = vmatpush1.msra.mxu0 0.0
        %294 = vmatprep.subr.mxu0 0.0
        %295 = vmatpush1.msra.mxu0 0.0
        %296 = vmatprep.subr.mxu0 0.0
        %297 = vmatpush1.msra.mxu0 0.0
        %298 = vmatprep.subr.mxu0 0.0
        %299 = vmatpush1.msra.mxu0 0.0
        %300 = vmatprep.subr.mxu0 0.0
        %301 = vmatpush1.msra.mxu0 0.0
        %302 = vmatprep.subr.mxu0 0.0
        %303 = vmatpush1.msra.mxu0 0.0
        %304 = vmatprep.subr.mxu0 0.0
        %305 = vmatpush1.msra.mxu0 0.0
        %306 = vmatprep.subr.mxu0 0.0
        %307 = vmatpush1.msra.mxu0 0.0
        %308 = vmatprep.subr.mxu0 0.0
        %309 = vmatpush1.msra.mxu0 0.0
        %310 = vmatprep.subr.mxu0 0.0
        %311 = vmatpush1.msra.mxu0 0.0
        %312 = vmatprep.subr.mxu0 0.0
        %313 = vmatpush1.msra.mxu0 0.0
        %314 = vmatprep.subr.mxu0 0.0
        %315 = vmatpush1.msra.mxu0 0.0
        %316 = vmatprep.subr.mxu0 0.0
        %317 = vmatpush1.msra.mxu0 0.0
        %318 = vmatprep.subr.mxu0 0.0
        %319 = vmatpush1.msra.mxu0 0.0
        %320 = vmatprep.subr.mxu0 0.0
        %321 = vmatpush1.msra.mxu0 0.0
        %322 = vmatprep.subr.mxu0 0.0
        %323 = vmatpush1.msra.mxu0 0.0
        %324 = vmatprep.subr.mxu0 0.0
        %325 = vmatpush1.msra.mxu0 0.0
        %326 = vmatprep.subr.mxu0 0.0
        %327 = vmatpush1.msra.mxu0 0.0
        %328 = vmatprep.subr.mxu0 0.0
        %329 = vmatpush1.msra.mxu0 0.0
        %330 = vmatprep.subr.mxu0 0.0
        %331 = vmatpush1.msra.mxu0 0.0
        %332 = vmatprep.subr.mxu0 0.0
        %333 = vmatpush1.msra.mxu0 0.0
        %334 = vmatprep.subr.mxu0 0.0
        %335 = vmatpush1.msra.mxu0 0.0
        %336 = vmatprep.subr.mxu0 0.0
        %337 = vmatpush1.msra.mxu0 0.0
        %338 = vmatprep.subr.mxu0 0.0
        %339 = vmatpush1.msra.mxu0 0.0
        %340 = vmatprep.subr.mxu0 0.0
        %341 = vmatpush1.msra.mxu0 0.0
        %342 = vmatprep.subr.mxu0 0.0
        %343 = vmatpush1.msra.mxu0 0.0
        %344 = vmatprep.subr.mxu0 0.0
        %345 = vmatpush1.msra.mxu0 0.0
        %346 = vmatprep.subr.mxu0 0.0
        %347 = vmatpush1.msra.mxu0 0.0
        %348 = vmatprep.mubr.f32.mxu0 0.0
        %349 = vmatmul.mubr.f32.gmra.mrb[0].mxu0 %v282
        %v350 = vpop.f32.mrb[0].mxu0
        %v351 = vadd.f32 %v278, %v350
        %v352 = vpop.f32.mrb[0].mxu0
        %353 = vdwg.mxu0
        %354 = vst [vmem:[%s228] sm:$0xff] %v351
        %v355 = vlaneseq
        %v356 = vand.u32 %v355, 127
        %v357 = vstv %s246
        %v358 = vadd.s32 %v357, %v356
        %vm359 = vcmp.lt.s32.totalorder %v358, 16
        %v360 = vsel %vm359, %v351, 0.0
        %v361 = vld [vmem:[%s238] sm:$0xff]
        %362 = vadd.xlane.f32.xlu0 %v360
        %v363 = vpop.xlane.xlu0 %362
        %v364 = vadd.f32 %v361, %v363
        %vm365 = vcmask 7168
        %366 = vst.msk [vmem:[%s238] sm:$0xff] %vm365, %v364
        %v367 = vld [vmem:[%s238] sm:$0xff]
        %v368 = vmul.f32 %v360, %v360
        %369 = vadd.xlane.f32.xlu0 %v368
        %v370 = vpop.xlane.xlu0 %369
        %v371 = vadd.f32 %v367, %v370
        %vm372 = vcmask 15368
        %373 = vst.msk [vmem:[%s238] sm:$0xff] %vm372, %v371
        %s374 = sand.u32 %s112, 1
        %s375 = scalar_lea.sflag [#allocation5], %s374
        %s376 = sand.u32 %s112, 1
        %s377 = smul.addr %s376, 8
        %s378 = scalar_lea.vmem [#allocation6], %s377
        %p379 = scmp.lt.s32.totalorder %s26, 1
        %s380 = scalar_select %p379, %s26, 1
        %s381 = smul.addr %s380, 8
        %s382 = scalar_lea.vmem %s4, %s381
        // Predicated region
        $region41: #{tpu_custom_call.1} parent=31 // pred_check
          %p383 = pneg %p122
        $region42: #{tpu_custom_call.1} parent=31 // pred_check_branch
          %385 = sbr.rel (%p383) target = $region44
        $region43: #{tpu_custom_call.1} parent=31 // pred_region
          %s387 = ssub.s32 128, 128
          %388 = vsyncadd %s375, %s387
          %s389 = sadd.s32 %s27, %s26
          %s390 = smul.addr %s389, 128
          %s391 = scalar_lea.hbm %s3, %s390
          %s393 = sshll.u32 %s378, 4
          %s394 = int_to_ptr.vmem [resolvable:$true] %s393
          %396 = dma.vmem_to_hbm [thread:$0]  %s394, 128, %s391, %s375
        $region44: #{tpu_custom_call.1} parent=31 // pred_fallthru
          _
        // Predicated region
        $region45: #{tpu_custom_call.1} parent=31 // pred_check
          %p397 = pneg %p148
        $region46: #{tpu_custom_call.1} parent=31 // pred_check_branch
          %399 = sbr.rel (%p397) target = $region48
        $region47: #{tpu_custom_call.1} parent=31 // pred_region
          _
        $region48: #{tpu_custom_call.1} parent=31 // pred_fallthru
          _
      $region32: #{tpu_custom_call.1} parent=5 // pred_fallthru
        _
      %p400 = scmp.le.s32.totalorder 2, %s17
      // Predicated region
      $region49: #{tpu_custom_call.1} parent=5 // pred_check
        %p401 = pneg %p400
      $region50: #{tpu_custom_call.1} parent=5 // pred_check_branch
        %403 = sbr.rel (%p401) target = $region52
      $region51: #{tpu_custom_call.1} parent=5 // pred_region
        %s404 = ssub.s32 %s17, 2
        // Predicated region
        $region53: #{tpu_custom_call.1} parent=51 // pred_check
          %p405 = pneg %p128
        $region54: #{tpu_custom_call.1} parent=51 // pred_check_branch
          %407 = sbr.rel (%p405) target = $region56
        $region55: #{tpu_custom_call.1} parent=51 // pred_region
          %s408 = sand.u32 %s113, 1
          %s409 = scalar_lea.sflag [#allocation5], %s408
          %s410 = sand.u32 %s113, 1
          %s411 = smul.addr %s410, 8
          %s412 = scalar_lea.vmem [#allocation6], %s411
          %413 = dma.done %s409, 128
        $region56: #{tpu_custom_call.1} parent=51 // pred_fallthru
          _
        // Predicated region
        $region57: #{tpu_custom_call.1} parent=51 // pred_check
          %p414 = pneg %p154
        $region58: #{tpu_custom_call.1} parent=51 // pred_check_branch
          %416 = sbr.rel (%p414) target = $region60
        $region59: #{tpu_custom_call.1} parent=51 // pred_region
          %p417 = scmp.lt.s32.totalorder %s28, 1
          %s418 = scalar_select %p417, %s28, 1
          %s419 = smul.addr %s418, 8
          %s420 = scalar_lea.vmem %s4, %s419
        $region60: #{tpu_custom_call.1} parent=51 // pred_fallthru
          _
      $region52: #{tpu_custom_call.1} parent=5 // pred_fallthru
        _
    $region6: #{tpu_custom_call.1} parent=1 // loop_footer
      %s21 = sadd.s32 1, %s17
    $region7: #{tpu_custom_call.1} parent=1 // loop_footer_branch
      %16 = sbr.rel target = $region3
    $region8: #{tpu_custom_call.1} parent=1 // loop_exit
      _
    %421 = vsyncpa [#allocation4], 1
    %s422 = scalar_lea.sflag [#allocation4], 1
    %423 = vsyncpa %s422, 1
    %424 = vsyncpa [#allocation5], 1
    %s425 = scalar_lea.sflag [#allocation5], 1
    %426 = vsyncpa %s425, 1

</llo_original>
